<compile_context>
chip_gen: v5e
topology: v5e:2x2
jax: 0.10.0
libtpu: 0.0.40
codegen_flags: <defaults>
</compile_context>

<pallas_src>
import functools

import jax
import jax.numpy as jnp
from jax import lax
from jax.experimental import pallas as pl
from jax.experimental.pallas import tpu as pltpu


# ----------------------------- kernels ---------------------------------------


def _masked_kernel(inv_ref, seq_ref, msk_ref, o_ref, acc_ref, *,
                   tn, n_total, ragged, mask_3d):
    # inv_ref: SMEM (1,) f32 = 1 / global_sum(msk)
    # seq_ref: (TB, TN, F)            current (batch-tile, node-tile)
    # msk_ref: (TB, TN) f32           lane-dense mask tile   (mask_3d=False)
    #          (TB, TN, 1) f32        sublane-aligned mask   (mask_3d=True)
    # o_ref:   (TB, F)                written on the last node step
    # acc_ref: (TB, F) f32            VMEM accumulator scratch
    ni = pl.program_id(1)
    last = pl.num_programs(1) - 1

    @pl.when(ni == 0)
    def _init():
        acc_ref[...] = jnp.zeros_like(acc_ref)

    def partial_sum(tail):
        seq = seq_ref[...].astype(jnp.float32)            # (TB, TN, F)
        m = msk_ref[...]                                   # f32, no cast needed
        w = m if mask_3d else m[:, :, None]
        prod = seq * w
        if tail:
            # Only the single partial tail tile pays the iota/where; masking
            # the product keeps stale-VMEM garbage (even NaN/Inf) out of acc.
            node = ni * tn + lax.broadcasted_iota(jnp.int32, prod.shape, 1)
            prod = jnp.where(node < n_total, prod, 0.0)
        return jnp.sum(prod, axis=1)                       # (TB, F) f32

    if ragged:
        @pl.when(ni < last)
        def _full():
            acc_ref[...] += partial_sum(False)

        @pl.when(ni == last)
        def _tail():
            acc_ref[...] += partial_sum(True)
    else:
        acc_ref[...] += partial_sum(False)

    @pl.when(ni == last)
    def _finalize():
        o_ref[...] = (acc_ref[...] * inv_ref[0]).astype(o_ref.dtype)


def _mean_kernel(seq_ref, o_ref, acc_ref, *,
                 tn, n_packed, inv_n, fold, f_out, ragged):
    # seq_ref: (TB, TN, FP)  lane-packed view, FP = fold * F
    # o_ref:   (TB, F)
    # acc_ref: (TB, FP) f32  packed accumulator; fold lane segments at the end
    ni = pl.program_id(1)
    last = pl.num_programs(1) - 1

    @pl.when(ni == 0)
    def _init():
        acc_ref[...] = jnp.zeros_like(acc_ref)

    def partial_sum(tail):
        x = seq_ref[...].astype(jnp.float32)               # (TB, TN, FP)
        if tail:
            node = ni * tn + lax.broadcasted_iota(jnp.int32, x.shape, 1)
            x = jnp.where(node < n_packed, x, 0.0)
        return jnp.sum(x, axis=1)                           # (TB, FP)

    if ragged:
        @pl.when(ni < last)
        def _full():
            acc_ref[...] += partial_sum(False)

        @pl.when(ni == last)
        def _tail():
            acc_ref[...] += partial_sum(True)
    else:
        acc_ref[...] += partial_sum(False)

    @pl.when(ni == last)
    def _finalize():
        acc = acc_ref[...]                                  # (TB, FP)
        total = acc[:, 0:f_out]
        for j in range(1, fold):                            # fold lane segments
            total = total + acc[:, j * f_out:(j + 1) * f_out]
        o_ref[...] = (total * inv_n).astype(o_ref.dtype)


# ----------------------------- planning ---------------------------------------


def _round_up(x, m):
    return ((x + m - 1) // m) * m


def _vmem_plan():
    """Generation-aware (seq-tile budget, scoped-VMEM limit), in bytes."""
    phys = None
    try:
        phys = int(pltpu.get_tpu_info().vmem_capacity_bytes)
    except Exception:
        phys = None
    kind = ""
    try:
        kind = jax.devices()[0].device_kind.lower()
    except Exception:
        pass
    if phys is None:
        phys = 64 << 20                       # conservative default (64 MiB class)
    if "v7" in kind:                          # never carry v5e/v6e numbers to v7x
        phys = min(phys, 64 << 20)
    if phys >= (96 << 20):                    # v5e / v6e: 128 MiB physical VMEM
        return 16 << 20, 64 << 20
    if phys >= (48 << 20):                    # v7x-class: 64 MiB physical VMEM
        return 10 << 20, 48 << 20
    return max(2 << 20, phys // 8), max(8 << 20, phys // 2)   # older / smaller parts


def _plan_tiles(B, n_nodes, f_block, itemsize, masked, budget):
    """Pick (tb, tn, mask_3d) so the lane-padded seq block fits the budget."""
    f_pad = _round_up(f_block, 128)           # honest lane-padded footprint
    row_bytes = f_pad * itemsize              # VMEM bytes per (batch row, node row)
    tb = B if B < 8 else 8                    # (B,F)/(B,N) blocks need tb == B or tb % 8

    mask_3d = False
    gran = 8
    if masked:
        # Prefer a lane-dense 2-D mask tile (tn % 128).  If even a 128-node
        # granule of seq overflows the budget (very wide F), switch to a
        # (B, N, 1) mask layout whose block only needs tn % 8.
        if tb * 128 * row_bytes <= budget or n_nodes <= 128:
            gran = 128
        else:
            mask_3d = True
            gran = 8

    tn = max(1, budget // (tb * row_bytes))
    if tn >= n_nodes:
        tn = n_nodes                          # full node axis in one tile
    else:
        tn = max(gran, (tn // gran) * gran)
        tn = min(tn, n_nodes)
    return tb, tn, mask_3d


# ----------------------------- wrapper ----------------------------------------


def avg_readout(seq: jax.Array, msk: jax.Array | None = None) -> jax.Array:
    """Pallas implementation of AvgReadout.forward.

    seq: (B, N, F) float array
    msk: (B, N) float array or None
    returns: (B, F)
    """
    B, N, F = seq.shape
    budget, vmem_limit = _vmem_plan()
    compiler_params = pltpu.CompilerParams(
        dimension_semantics=("parallel", "arbitrary"),
        vmem_limit_bytes=vmem_limit,
    )

    if msk is None:
        # Lane-pack small feature dims: (B, N, F) -> (B, N//r, r*F) is a free
        # view (row-major HBM layout unchanged) that restores lane density.
        r = max(1, 128 // F) if F < 128 else 1
        while r > 1 and N % r:
            r -= 1
        n_packed, f_packed = N // r, r * F
        seq_v = seq.reshape(B, n_packed, f_packed) if r > 1 else seq

        tb, tn, _ = _plan_tiles(B, n_packed, f_packed, seq.dtype.itemsize,
                                masked=False, budget=budget)
        ragged = (n_packed % tn) != 0
        grid = (pl.cdiv(B, tb), pl.cdiv(n_packed, tn))

        kernel = functools.partial(_mean_kernel, tn=tn, n_packed=n_packed,
                                   inv_n=1.0 / N, fold=r, f_out=F, ragged=ragged)
        return pl.pallas_call(
            kernel,
            out_shape=jax.ShapeDtypeStruct((B, F), seq.dtype),
            grid_spec=pltpu.PrefetchScalarGridSpec(
                num_scalar_prefetch=0,
                grid=grid,
                in_specs=[pl.BlockSpec((tb, tn, f_packed), lambda b, n: (b, n, 0))],
                out_specs=pl.BlockSpec((tb, F), lambda b, n: (b, 0)),
                scratch_shapes=[pltpu.VMEM((tb, f_packed), jnp.float32)],
            ),
            compiler_params=compiler_params,
        )(seq_v)

    # ---- masked path -----------------------------------------------------
    # Mask stays float32 end-to-end (no downcast).  The global divisor
    # (torch.sum over ALL batches & nodes) is reduced once here; only its
    # reciprocal (one f32 scalar in SMEM) enters the kernel.
    msk32 = msk.astype(jnp.float32)
    inv_total = (1.0 / jnp.sum(msk32, dtype=jnp.float32)).reshape(1)

    tb, tn, mask_3d = _plan_tiles(B, N, F, seq.dtype.itemsize,
                                  masked=True, budget=budget)
    ragged = (N % tn) != 0
    grid = (pl.cdiv(B, tb), pl.cdiv(N, tn))

    if mask_3d:
        msk_in = msk32.reshape(B, N, 1)
        msk_spec = pl.BlockSpec((tb, tn, 1), lambda b, n: (b, n, 0))
    else:
        msk_in = msk32
        msk_spec = pl.BlockSpec((tb, tn), lambda b, n: (b, n))

    kernel = functools.partial(_masked_kernel, tn=tn, n_total=N,
                               ragged=ragged, mask_3d=mask_3d)
    return pl.pallas_call(
        kernel,
        out_shape=jax.ShapeDtypeStruct((B, F), seq.dtype),
        grid_spec=pltpu.PrefetchScalarGridSpec(
            num_scalar_prefetch=0,
            grid=grid,
            in_specs=[
                pl.BlockSpec(memory_space=pltpu.MemorySpace.SMEM),   # 1/sum(msk)
                pl.BlockSpec((tb, tn, F), lambda b, n: (b, n, 0)),   # seq tile
                msk_spec,                                            # mask tile
            ],
            out_specs=pl.BlockSpec((tb, F), lambda b, n: (b, 0)),
            scratch_shapes=[pltpu.VMEM((tb, F), jnp.float32)],
        ),
        compiler_params=compiler_params,
    )(inv_total, seq, msk_in)


# ----------------------------- demo / check -----------------------------------


if __name__ == "__main__":
    key = jax.random.PRNGKey(0)
    k_seq, k_msk, k_seq2, k_msk2 = jax.random.split(key, 4)

    # Case 1: F < 128 (exercises the lane-packed mean path), binary mask.
    B, N, F = 2, 8, 32
    seq = jax.random.normal(k_seq, (B, N, F), dtype=jnp.float32)
    msk = (jax.random.uniform(k_msk, (B, N)) > 0.3).astype(jnp.float32)

    out_masked = jax.block_until_ready(avg_readout(seq, msk))
    ref_masked = jnp.sum(seq * msk[..., None], axis=1) / jnp.sum(msk)
    out_mean = jax.block_until_ready(avg_readout(seq, None))
    ref_mean = jnp.mean(seq, axis=1)

    assert out_masked.shape == (B, F) and out_mean.shape == (B, F)
    assert jnp.allclose(out_masked, ref_masked, atol=1e-5, rtol=1e-5)
    assert jnp.allclose(out_mean, ref_mean, atol=1e-5, rtol=1e-5)

    # Case 2: F > 128, odd B/N (unpacked path, full-dim blocks), soft mask.
    B2, N2, F2 = 3, 7, 160
    seq2 = jax.random.normal(k_seq2, (B2, N2, F2), dtype=jnp.float32)
    msk2 = jax.random.uniform(k_msk2, (B2, N2), dtype=jnp.float32)

    out_masked2 = jax.block_until_ready(avg_readout(seq2, msk2))
    ref_masked2 = jnp.sum(seq2 * msk2[..., None], axis=1) / jnp.sum(msk2)
    out_mean2 = jax.block_until_ready(avg_readout(seq2, None))
    ref_mean2 = jnp.mean(seq2, axis=1)

    assert jnp.allclose(out_masked2, ref_masked2, atol=1e-5, rtol=1e-5)
    assert jnp.allclose(out_mean2, ref_mean2, atol=1e-5, rtol=1e-5)

    print("KERNEL_OK")
</pallas_src>

<mosaic_0001>
module attributes {stable_mosaic.version = 11 : i64} {
  func.func @_masked_kernel(%arg0: i32, %arg1: i32, %arg2: memref<1xf32, #tpu.memory_space<smem>>, %arg3: memref<2x8x32xf32, #tpu.memory_space<vmem>>, %arg4: memref<2x8xf32, #tpu.memory_space<vmem>>, %arg5: memref<2x32xf32, #tpu.memory_space<vmem>>, %arg6: memref<2x32xf32, #tpu.memory_space<vmem>>) attributes {dimension_semantics = [#tpu.dimension_semantics<parallel>, #tpu.dimension_semantics<arbitrary>], iteration_bounds = array<i64: 1, 1>, scalar_prefetch = 0 : i64, scratch_operands = 1 : i64, tpu.core_type = #tpu.core_type<tc>, window_params = [{transform_indices = @transform_0, window_bounds = array<i64: 1>}, {transform_indices = @transform_1, window_bounds = array<i64: 2, 8, 32>}, {transform_indices = @transform_2, window_bounds = array<i64: 2, 8>}, {transform_indices = @transform_3, window_bounds = array<i64: 2, 32>}]} {
    %c0_i32 = arith.constant 0 : i32
    %0 = arith.cmpi eq, %arg1, %c0_i32 : i32
    %1 = arith.extui %0 : i1 to i32
    %c0_i32_0 = arith.constant 0 : i32
    %2 = arith.cmpi ne, %1, %c0_i32_0 : i32
    scf.if %2 {
      %cst_11 = arith.constant 0.000000e+00 : f32
      %15 = vector.broadcast %cst_11 : f32 to vector<2x32xf32>
      %c0_12 = arith.constant 0 : index
      %c0_13 = arith.constant 0 : index
      %16 = vector.load %arg6[%c0_12, %c0_13] : memref<2x32xf32, #tpu.memory_space<vmem>>, vector<2x32xf32>
      tpu.vector_store %arg6[%c0_12, %c0_13], %15 {strides = array<i32>} : memref<2x32xf32, #tpu.memory_space<vmem>>, vector<2x32xf32>,
    } else {
    }
    %c0 = arith.constant 0 : index
    %c0_1 = arith.constant 0 : index
    %3 = vector.load %arg6[%c0, %c0_1] : memref<2x32xf32, #tpu.memory_space<vmem>>, vector<2x32xf32>
    %c0_2 = arith.constant 0 : index
    %c0_3 = arith.constant 0 : index
    %c0_4 = arith.constant 0 : index
    %4 = vector.load %arg3[%c0_2, %c0_3, %c0_4] : memref<2x8x32xf32, #tpu.memory_space<vmem>>, vector<2x8x32xf32>
    %c0_5 = arith.constant 0 : index
    %c0_6 = arith.constant 0 : index
    %5 = vector.load %arg4[%c0_5, %c0_6] : memref<2x8xf32, #tpu.memory_space<vmem>>, vector<2x8xf32>
    %6 = vector.shape_cast %5 : vector<2x8xf32> to vector<2x8x1xf32>
    %7 = vector.broadcast %6 : vector<2x8x1xf32> to vector<2x8x32xf32>
    %8 = arith.mulf %4, %7 : vector<2x8x32xf32>
    %cst = arith.constant dense<0.000000e+00> : vector<2x32xf32>
    %9 = vector.multi_reduction <add>, %8, %cst [1] : vector<2x8x32xf32> to vector<2x32xf32>
    %10 = arith.addf %3, %9 : vector<2x32xf32>
    %c0_7 = arith.constant 0 : index
    %c0_8 = arith.constant 0 : index
    %11 = vector.load %arg6[%c0_7, %c0_8] : memref<2x32xf32, #tpu.memory_space<vmem>>, vector<2x32xf32>
    tpu.vector_store %arg6[%c0_7, %c0_8], %10 {strides = array<i32>} : memref<2x32xf32, #tpu.memory_space<vmem>>, vector<2x32xf32>,
    %c0_i32_9 = arith.constant 0 : i32
    %12 = arith.cmpi eq, %arg1, %c0_i32_9 : i32
    %13 = arith.extui %12 : i1 to i32
    %c0_i32_10 = arith.constant 0 : i32
    %14 = arith.cmpi ne, %13, %c0_i32_10 : i32
    scf.if %14 {
      %c0_11 = arith.constant 0 : index
      %c0_12 = arith.constant 0 : index
      %15 = vector.load %arg6[%c0_11, %c0_12] : memref<2x32xf32, #tpu.memory_space<vmem>>, vector<2x32xf32>
      %c0_13 = arith.constant 0 : index
      %16 = memref.load %arg2[%c0_13] : memref<1xf32, #tpu.memory_space<smem>>
      %17 = vector.broadcast %16 : f32 to vector<2x32xf32>
      %18 = arith.mulf %15, %17 : vector<2x32xf32>
      %c0_14 = arith.constant 0 : index
      %c0_15 = arith.constant 0 : index
      %19 = vector.load %arg5[%c0_14, %c0_15] : memref<2x32xf32, #tpu.memory_space<vmem>>, vector<2x32xf32>
      tpu.vector_store %arg5[%c0_14, %c0_15], %18 {strides = array<i32>} : memref<2x32xf32, #tpu.memory_space<vmem>>, vector<2x32xf32>,
    } else {
    }
    return
  }
  func.func @transform_0(%arg0: i32, %arg1: i32) -> i32 {
    %c0_i32 = arith.constant 0 : i32
    %c0_i32_0 = arith.constant 0 : i32
    return %c0_i32 : i32
  }
  func.func @transform_1(%arg0: i32, %arg1: i32) -> (i32, i32, i32) {
    %c0_i32 = arith.constant 0 : i32
    %c0_i32_0 = arith.constant 0 : i32
    return %arg0, %arg1, %c0_i32 : i32, i32, i32
  }
  func.func @transform_2(%arg0: i32, %arg1: i32) -> (i32, i32) {
    %c0_i32 = arith.constant 0 : i32
    return %arg0, %arg1 : i32, i32
  }
  func.func @transform_3(%arg0: i32, %arg1: i32) -> (i32, i32) {
    %c0_i32 = arith.constant 0 : i32
    %c0_i32_0 = arith.constant 0 : i32
    return %arg0, %c0_i32 : i32, i32
  }
}

</mosaic_0001>

<llo_original>
// kernel: tpu_custom_call.1
$region0: #{tpu_custom_call.1}
  #allocation0 [shape = 'u32[]', space=smem, size = 0x4, offset = 0x4, fixed_abs, tag = 'smem constant byte address 0x4 - core index']
  #allocation1 [shape = 'u32[72,128]{1,0:T(1,128)}', space=vmem, size = 0x9000, scoped, tag = 'internal scratch']
  #allocation2 [shape = 'f32[2,32]{1,0:T(2,128)}', space=vmem, size = 0x400, scoped, tag = 'scratch operand']
  #allocation3 [shape = 'f32[1]{0:T(128)S(6)}', space=smem, size = 0x200, scoped, tag = 'scoped memory for tpu_custom_call.1']
  %s0 = inlined_call_operand.<no memory space> [shape: f32[1], index: 0, kind: input, shape index: {}]
  %s1 = inlined_call_operand.hbm [shape: f32[2,8,32], index: 1, kind: input, shape index: {}]
  %s2 = inlined_call_operand.vmem [shape: f32[2,8], index: 2, kind: input, shape index: {}]
  %s3 = inlined_call_operand.hbm [shape: f32[2,32], index: 3, kind: output, shape index: {}]
  %s4 = sld [smem:[#allocation0]]
  $region34: #{tpu_custom_call.1} parent=0
    _
  %s6 = ssub.s32 1, %s4
  %s7 = scalar_select 0, %s6, %s4
  %8 = sst [smem:[#allocation3]] %s0
  $region1: #{tpu_custom_call.1} parent=0
    #allocation4 [shape = 'u8[8192]{0}', space=vmem, size = 0x2000, scoped, tag = 'input window, operand 1, single buffered']
    #allocation5 [shape = 's32[1]{0}', space=sflag, size = 0x4, scoped, tag = 'scoped memory for tpu_custom_call.1']
    #allocation6 [shape = 's32[1]{0}', space=sflag, size = 0x4, scoped, tag = 'scoped memory for tpu_custom_call.1']
    #allocation7 [shape = 'u8[1024]{0}', space=vmem, size = 0x400, scoped, tag = 'output window, operand 0, single buffered']
    %9 = vsyncpa [#allocation5], 0
    %10 = vsyncpa [#allocation6], 0
    // Predicated region
    $region2: #{tpu_custom_call.1} parent=1 // pred_check
      _
    $region3: #{tpu_custom_call.1} parent=1 // pred_check_branch
      %12 = sbr.rel (0) target = $region5
    $region4: #{tpu_custom_call.1} parent=1 // pred_region
      _
    $region5: #{tpu_custom_call.1} parent=1 // pred_fallthru
      _
    // Predicated region
    $region6: #{tpu_custom_call.1} parent=1 // pred_check
      _
    $region7: #{tpu_custom_call.1} parent=1 // pred_check_branch
      %14 = sbr.rel (0) target = $region9
    $region8: #{tpu_custom_call.1} parent=1 // pred_region
      %16 = vsyncadd [#allocation5], 0
      %s17 = sshll.u32 %s1, 4
      %s18 = int_to_ptr.hbm [resolvable:$true] %s17
      %s19 = sshll.u32 [#allocation4], 4
      %s20 = int_to_ptr.vmem [resolvable:$true] %s19
      %25 = dma.hbm_to_vmem [thread:$0]  %s18, 256, %s20, [#allocation5], 128, 128, 8
    $region9: #{tpu_custom_call.1} parent=1 // pred_fallthru
      _
    // Predicated region
    $region10: #{tpu_custom_call.1} parent=1 // pred_check
      _
    $region11: #{tpu_custom_call.1} parent=1 // pred_check_branch
      %27 = sbr.rel (0) target = $region13
    $region12: #{tpu_custom_call.1} parent=1 // pred_region
      _
    $region13: #{tpu_custom_call.1} parent=1 // pred_fallthru
      _
    // Predicated region
    $region14: #{tpu_custom_call.1} parent=1 // pred_check
      _
    $region15: #{tpu_custom_call.1} parent=1 // pred_check_branch
      %29 = sbr.rel (0) target = $region17
    $region16: #{tpu_custom_call.1} parent=1 // pred_region
      %31 = dma.done [#allocation5], 256
    $region17: #{tpu_custom_call.1} parent=1 // pred_fallthru
      _
    %p32 = scmp.eq.s32.totalorder 0, 0
    // Predicated region
    $region18: #{tpu_custom_call.1} parent=1 // pred_check
      %p33 = pneg %p32
    $region19: #{tpu_custom_call.1} parent=1 // pred_check_branch
      %35 = sbr.rel (%p33) target = $region21
    $region20: #{tpu_custom_call.1} parent=1 // pred_region
      %vm36 = vcmask 254976
      %37 = vst.msk [vmem:[#allocation2] sm:$0x3] %vm36, 0.0
    $region21: #{tpu_custom_call.1} parent=1 // pred_fallthru
      _
    %v38 = vld [vmem:[#allocation2] sm:$0x3]
    %v39 = vld [vmem:[#allocation4] sm:$0xff]
    %v40 = vld [vmem:[#allocation4 + $0x8] sm:$0xff]
    %v41 = vld [vmem:[%s2] sm:$0x3]
    %v42 = vperm.slane %v41, 0
    %v43 = vlaneseq
    %v44 = vshrl.u32 %v43, 7
    %46 = vset.pattern.permute.xlu0 %v44
    %47 = vperm.xlu0 %46, %v42
    %v48 = vpop.permute.xlu0 %47
    %v49 = vperm.slane %v41, 1
    %v50 = vlaneseq
    %v51 = vshrl.u32 %v50, 7
    %53 = vset.pattern.permute.xlu0 %v51
    %54 = vperm.xlu0 %53, %v49
    %v55 = vpop.permute.xlu0 %54
    %v56 = vmul.f32 %v39, %v48
    %v57 = vmul.f32 %v40, %v55
    %vm58 = vcmask 261120
    %v59 = vsel %vm58, %v56, 0.0
    %v60 = vrot.slane %v59, 4
    %v61 = vadd.f32 %v59, %v60
    %v62 = vrot.slane %v61, 2
    %v63 = vadd.f32 %v61, %v62
    %v64 = vrot.slane %v63, 1
    %v65 = vadd.f32 %v63, %v64
    %v66 = vsel %vm58, %v57, 0.0
    %v67 = vrot.slane %v66, 4
    %v68 = vadd.f32 %v66, %v67
    %v69 = vrot.slane %v68, 2
    %v70 = vadd.f32 %v68, %v69
    %v71 = vrot.slane %v70, 1
    %v72 = vadd.f32 %v70, %v71
    %vm75 = vcmask 1041409
    %v76 = vsel %vm75, %v72, %v65
    %v78 = vadd.f32 %v38, %v76
    %vm79 = vcmask 254976
    %80 = vst.msk [vmem:[#allocation2] sm:$0x3] %vm79, %v78
    // Predicated region
    $region22: #{tpu_custom_call.1} parent=1 // pred_check
      %p81 = pneg %p32
    $region23: #{tpu_custom_call.1} parent=1 // pred_check_branch
      %83 = sbr.rel (%p81) target = $region25
    $region24: #{tpu_custom_call.1} parent=1 // pred_region
      %v84 = vld [vmem:[#allocation2] sm:$0x3]
      %s85 = sld [smem:[#allocation3]]
      %v86 = vstv %s85
      %v87 = vmul.f32 %v84, %v86
      %88 = vst.msk [vmem:[#allocation7] sm:$0x3] %vm79, %v87
    $region25: #{tpu_custom_call.1} parent=1 // pred_fallthru
      _
    // Predicated region
    $region26: #{tpu_custom_call.1} parent=1 // pred_check
      _
    $region27: #{tpu_custom_call.1} parent=1 // pred_check_branch
      %90 = sbr.rel (0) target = $region29
    $region28: #{tpu_custom_call.1} parent=1 // pred_region
      %92 = vsyncadd [#allocation6], 0
      %s94 = sshll.u32 [#allocation7], 4
      %s95 = int_to_ptr.vmem [resolvable:$true] %s94
      %s96 = sshll.u32 %s3, 4
      %s97 = int_to_ptr.hbm [resolvable:$true] %s96
      %99 = dma.vmem_to_hbm [thread:$0]  %s95, 32, %s97, [#allocation6]
    $region29: #{tpu_custom_call.1} parent=1 // pred_fallthru
      _
    // Predicated region
    $region30: #{tpu_custom_call.1} parent=1 // pred_check
      _
    $region31: #{tpu_custom_call.1} parent=1 // pred_check_branch
      %101 = sbr.rel (0) target = $region33
    $region32: #{tpu_custom_call.1} parent=1 // pred_region
      %103 = dma.done [#allocation6], 32
    $region33: #{tpu_custom_call.1} parent=1 // pred_fallthru
      _
    %104 = vsyncpa [#allocation5], 1
    %105 = vsyncpa [#allocation6], 1

</llo_original>
